<compile_context>
chip_gen: v5e
topology: v5e:2x2
jax: 0.10.0
libtpu: 0.0.40
codegen_flags: <defaults>
</compile_context>

<pallas_src>
import functools

import jax
import jax.numpy as jnp
from jax.experimental import pallas as pl
from jax.experimental.pallas import tpu as pltpu

# ---------------- configuration (the "opt" object) ----------------
M = 64               # opt.M : signal length
L = 8                # opt.L : number of multipath taps
DECAY = 4.0          # opt.decay
P = 1                # opt.P : number of antennas / packets
NOISE_FACTOR = 100.0 # hard-coded in PLAIN.forward
PACK = 2 * M         # 128 lanes per row: [real(0..M) | imag(0..M)]  (lane-dense)


def _round_up(x, m):
    return (x + m - 1) // m * m


# ---------------- the single fused Pallas kernel ----------------
def _plain_channel_kernel(x_ref, cof_ref, noise_ref, snr_ref, out_ref, *,
                          m, ltaps, noise_factor):
    row_tile = x_ref.shape[0]

    # packed complex signal: lanes [0, m) real, [m, 2m) imag
    xr = x_ref[:, :m]
    xi = x_ref[:, m:]

    # (1) causal complex convolution y[t] = sum_l cof[l] * x[t-l]  (x[t<0] = 0).
    #     Shift-by-l is an explicit zero-prefix concat (pure lax ops -> lowers on
    #     Mosaic and in interpret mode; ltaps == 8 is statically unrolled).
    acc_r = jnp.zeros((row_tile, m), jnp.float32)
    acc_i = jnp.zeros((row_tile, m), jnp.float32)
    for l in range(ltaps):
        if l == 0:
            sr, si = xr, xi
        else:
            z = jnp.zeros((row_tile, l), jnp.float32)
            sr = jnp.concatenate([z, xr[:, :m - l]], axis=1)
            si = jnp.concatenate([z, xi[:, :m - l]], axis=1)
        cr = cof_ref[:, l:l + 1]            # real tap l   (row_tile, 1)
        ci = cof_ref[:, ltaps + l:ltaps + l + 1]  # imag tap l
        acc_r = acc_r + cr * sr - ci * si
        acc_i = acc_i + cr * si + ci * sr

    # lane-dense packed output [y_r | y_i]
    y_pack = jnp.concatenate([acc_r, acc_i], axis=1)     # (row_tile, 2m)

    # (2) per-row mean power over the m complex samples:
    #     sum over all 2m packed lanes of y^2 == sum(|y|^2); divide by m.
    pwr = jnp.sum(y_pack * y_pack, axis=-1, keepdims=True) * (1.0 / m)
    noise_pwr = pwr * snr_ref[0]                          # pwr * 10**(-SNR/10)
    scale = jnp.sqrt(noise_pwr * 0.5) * noise_factor

    # (3) add exponential noise (same packed [E_r | E_i] layout) and store.
    out_ref[...] = y_pack + scale * noise_ref[...]


# ---------------- PLAIN.forward ----------------
def plain_forward(xr, xi, snr_db, key):
    """x = xr + 1j*xi, shape (N, P, M).  Returns (rx_r, rx_i), each (N, P, M)."""
    N, Pdim, m = xr.shape
    assert m == M
    rows = N * Pdim

    # row tiling: multiple of 8; prefer >= 2 grid steps (v7x megacore), cap at 512
    row_tile = _round_up(rows, 8)
    if row_tile > 8:
        row_tile = _round_up((rows + 1) // 2, 8)
    row_tile = min(row_tile, 512)
    rows_p = _round_up(rows, row_tile)
    grid = (rows_p // row_tile,)

    # --- Channel.sample(): Rayleigh taps with exponential power-delay profile ---
    k_cr, k_ci, k_er, k_ei = jax.random.split(key, 4)
    power = jnp.exp(-jnp.arange(L, dtype=jnp.float32) / DECAY)
    power = power / jnp.sum(power)
    amp = jnp.sqrt(power / 2.0)
    cof_r = amp * jax.random.normal(k_cr, (rows, L), jnp.float32)
    cof_i = amp * jax.random.normal(k_ci, (rows, L), jnp.float32)
    cof_pack = jnp.pad(jnp.concatenate([cof_r, cof_i], axis=-1),
                       ((0, rows_p - rows), (0, 0)))          # (rows_p, 2L)

    # packed, lane-dense input / noise slabs: [real | imag] in 128 lanes per row
    x_pack = jnp.pad(
        jnp.concatenate([xr.reshape(rows, m), xi.reshape(rows, m)], axis=-1),
        ((0, rows_p - rows), (0, 0)))                         # (rows_p, 2M)

    # TODO(synk): reference uses np.random.exponential(y) (per-element scale = y,
    # ill-defined for a complex tensor); unit-scale Exp(1) samples are used here
    # with the same sqrt(noise_pwr/2)*100 scaling.
    er = jax.random.exponential(k_er, (rows, m), jnp.float32)
    ei = jax.random.exponential(k_ei, (rows, m), jnp.float32)
    noise_pack = jnp.pad(jnp.concatenate([er, ei], axis=-1),
                         ((0, rows_p - rows), (0, 0)))        # (rows_p, 2M)

    snr_arr = (10.0 ** (-jnp.asarray(snr_db, jnp.float32) / 10.0)).reshape(1)

    kernel = functools.partial(_plain_channel_kernel, m=m, ltaps=L,
                               noise_factor=NOISE_FACTOR)
    out = pl.pallas_call(
        kernel,
        grid=grid,
        in_specs=[
            pl.BlockSpec((row_tile, PACK), lambda i: (i, 0)),      # packed x
            pl.BlockSpec((row_tile, 2 * L), lambda i: (i, 0)),     # dense taps
            pl.BlockSpec((row_tile, PACK), lambda i: (i, 0)),      # packed Exp(1)
            pl.BlockSpec(memory_space=pltpu.MemorySpace.SMEM),     # 10**(-SNR/10)
        ],
        out_specs=pl.BlockSpec((row_tile, PACK), lambda i: (i, 0)),  # packed rx
        out_shape=jax.ShapeDtypeStruct((rows_p, PACK), jnp.float32),
        compiler_params=pltpu.CompilerParams(
            dimension_semantics=("parallel",)),
    )(x_pack, cof_pack, noise_pack, snr_arr)

    # rx = y_noisy[..., :M]  (conv output length is already M, so this is all of it)
    rx_r = out[:rows, :m].reshape(N, Pdim, m)
    rx_i = out[:rows, m:].reshape(N, Pdim, m)
    return rx_r, rx_i


if __name__ == "__main__":
    key = jax.random.PRNGKey(0)
    kx_r, kx_i, k_chan = jax.random.split(key, 3)

    # complex input x: (N, P, M), carried as real/imag float32 planes
    N = 2
    xr = jax.random.normal(kx_r, (N, P, M), jnp.float32)
    xi = jax.random.normal(kx_i, (N, P, M), jnp.float32)
    SNR = 10.0

    rx_r, rx_i = jax.jit(plain_forward)(xr, xi, SNR, k_chan)
    jax.block_until_ready((rx_r, rx_i))
    print("KERNEL_OK")
</pallas_src>

<mosaic_0001>
module attributes {stable_mosaic.version = 11 : i64} {
  func.func @_plain_channel_kernel(%arg0: i32, %arg1: memref<8x128xf32, #tpu.memory_space<vmem>>, %arg2: memref<8x16xf32, #tpu.memory_space<vmem>>, %arg3: memref<8x128xf32, #tpu.memory_space<vmem>>, %arg4: memref<1xf32, #tpu.memory_space<smem>>, %arg5: memref<8x128xf32, #tpu.memory_space<vmem>>) attributes {dimension_semantics = [#tpu.dimension_semantics<parallel>], iteration_bounds = array<i64: 1>, scalar_prefetch = 0 : i64, scratch_operands = 0 : i64, tpu.core_type = #tpu.core_type<tc>, window_params = [{transform_indices = @transform_0, window_bounds = array<i64: 8, 128>}, {transform_indices = @transform_1, window_bounds = array<i64: 8, 16>}, {transform_indices = @transform_2, window_bounds = array<i64: 8, 128>}, {transform_indices = @transform_3, window_bounds = array<i64: 1>}, {transform_indices = @transform_4, window_bounds = array<i64: 8, 128>}]} {
    %c0 = arith.constant 0 : index
    %c0_0 = arith.constant 0 : index
    %0 = vector.load %arg1[%c0, %c0_0] : memref<8x128xf32, #tpu.memory_space<vmem>>, vector<8x64xf32>
    %c0_1 = arith.constant 0 : index
    %c64 = arith.constant 64 : index
    %1 = vector.load %arg1[%c0_1, %c64] : memref<8x128xf32, #tpu.memory_space<vmem>>, vector<8x64xf32>
    %cst = arith.constant 0.000000e+00 : f32
    %2 = vector.broadcast %cst : f32 to vector<8x64xf32>
    %cst_2 = arith.constant 0.000000e+00 : f32
    %3 = vector.broadcast %cst_2 : f32 to vector<8x64xf32>
    %c0_3 = arith.constant 0 : index
    %c0_4 = arith.constant 0 : index
    %4 = vector.load %arg2[%c0_3, %c0_4] : memref<8x16xf32, #tpu.memory_space<vmem>>, vector<8x1xf32>
    %c0_5 = arith.constant 0 : index
    %c8 = arith.constant 8 : index
    %5 = vector.load %arg2[%c0_5, %c8] : memref<8x16xf32, #tpu.memory_space<vmem>>, vector<8x1xf32>
    %6 = vector.broadcast %4 : vector<8x1xf32> to vector<8x64xf32>
    %7 = arith.mulf %6, %0 : vector<8x64xf32>
    %8 = arith.addf %2, %7 : vector<8x64xf32>
    %9 = vector.broadcast %5 : vector<8x1xf32> to vector<8x64xf32>
    %10 = arith.mulf %9, %1 : vector<8x64xf32>
    %11 = arith.subf %8, %10 : vector<8x64xf32>
    %12 = vector.broadcast %4 : vector<8x1xf32> to vector<8x64xf32>
    %13 = arith.mulf %12, %1 : vector<8x64xf32>
    %14 = arith.addf %3, %13 : vector<8x64xf32>
    %15 = vector.broadcast %5 : vector<8x1xf32> to vector<8x64xf32>
    %16 = arith.mulf %15, %0 : vector<8x64xf32>
    %17 = arith.addf %14, %16 : vector<8x64xf32>
    %cst_6 = arith.constant 0.000000e+00 : f32
    %18 = vector.broadcast %cst_6 : f32 to vector<8x1xf32>
    %19 = vector.extract_strided_slice %0 {offsets = [0, 0], sizes = [8, 63], strides = [1, 1]} : vector<8x64xf32> to vector<8x63xf32>
    %20 = tpu.concatenate %18, %19 in 1 : vector<8x1xf32>, vector<8x63xf32> -> vector<8x64xf32>
    %21 = vector.extract_strided_slice %1 {offsets = [0, 0], sizes = [8, 63], strides = [1, 1]} : vector<8x64xf32> to vector<8x63xf32>
    %22 = tpu.concatenate %18, %21 in 1 : vector<8x1xf32>, vector<8x63xf32> -> vector<8x64xf32>
    %c0_7 = arith.constant 0 : index
    %c1 = arith.constant 1 : index
    %23 = vector.load %arg2[%c0_7, %c1] : memref<8x16xf32, #tpu.memory_space<vmem>>, vector<8x1xf32>
    %c0_8 = arith.constant 0 : index
    %c9 = arith.constant 9 : index
    %24 = vector.load %arg2[%c0_8, %c9] : memref<8x16xf32, #tpu.memory_space<vmem>>, vector<8x1xf32>
    %25 = vector.broadcast %23 : vector<8x1xf32> to vector<8x64xf32>
    %26 = arith.mulf %25, %20 : vector<8x64xf32>
    %27 = arith.addf %11, %26 : vector<8x64xf32>
    %28 = vector.broadcast %24 : vector<8x1xf32> to vector<8x64xf32>
    %29 = arith.mulf %28, %22 : vector<8x64xf32>
    %30 = arith.subf %27, %29 : vector<8x64xf32>
    %31 = vector.broadcast %23 : vector<8x1xf32> to vector<8x64xf32>
    %32 = arith.mulf %31, %22 : vector<8x64xf32>
    %33 = arith.addf %17, %32 : vector<8x64xf32>
    %34 = vector.broadcast %24 : vector<8x1xf32> to vector<8x64xf32>
    %35 = arith.mulf %34, %20 : vector<8x64xf32>
    %36 = arith.addf %33, %35 : vector<8x64xf32>
    %cst_9 = arith.constant 0.000000e+00 : f32
    %37 = vector.broadcast %cst_9 : f32 to vector<8x2xf32>
    %38 = vector.extract_strided_slice %0 {offsets = [0, 0], sizes = [8, 62], strides = [1, 1]} : vector<8x64xf32> to vector<8x62xf32>
    %39 = tpu.concatenate %37, %38 in 1 : vector<8x2xf32>, vector<8x62xf32> -> vector<8x64xf32>
    %40 = vector.extract_strided_slice %1 {offsets = [0, 0], sizes = [8, 62], strides = [1, 1]} : vector<8x64xf32> to vector<8x62xf32>
    %41 = tpu.concatenate %37, %40 in 1 : vector<8x2xf32>, vector<8x62xf32> -> vector<8x64xf32>
    %c0_10 = arith.constant 0 : index
    %c2 = arith.constant 2 : index
    %42 = vector.load %arg2[%c0_10, %c2] : memref<8x16xf32, #tpu.memory_space<vmem>>, vector<8x1xf32>
    %c0_11 = arith.constant 0 : index
    %c10 = arith.constant 10 : index
    %43 = vector.load %arg2[%c0_11, %c10] : memref<8x16xf32, #tpu.memory_space<vmem>>, vector<8x1xf32>
    %44 = vector.broadcast %42 : vector<8x1xf32> to vector<8x64xf32>
    %45 = arith.mulf %44, %39 : vector<8x64xf32>
    %46 = arith.addf %30, %45 : vector<8x64xf32>
    %47 = vector.broadcast %43 : vector<8x1xf32> to vector<8x64xf32>
    %48 = arith.mulf %47, %41 : vector<8x64xf32>
    %49 = arith.subf %46, %48 : vector<8x64xf32>
    %50 = vector.broadcast %42 : vector<8x1xf32> to vector<8x64xf32>
    %51 = arith.mulf %50, %41 : vector<8x64xf32>
    %52 = arith.addf %36, %51 : vector<8x64xf32>
    %53 = vector.broadcast %43 : vector<8x1xf32> to vector<8x64xf32>
    %54 = arith.mulf %53, %39 : vector<8x64xf32>
    %55 = arith.addf %52, %54 : vector<8x64xf32>
    %cst_12 = arith.constant 0.000000e+00 : f32
    %56 = vector.broadcast %cst_12 : f32 to vector<8x3xf32>
    %57 = vector.extract_strided_slice %0 {offsets = [0, 0], sizes = [8, 61], strides = [1, 1]} : vector<8x64xf32> to vector<8x61xf32>
    %58 = tpu.concatenate %56, %57 in 1 : vector<8x3xf32>, vector<8x61xf32> -> vector<8x64xf32>
    %59 = vector.extract_strided_slice %1 {offsets = [0, 0], sizes = [8, 61], strides = [1, 1]} : vector<8x64xf32> to vector<8x61xf32>
    %60 = tpu.concatenate %56, %59 in 1 : vector<8x3xf32>, vector<8x61xf32> -> vector<8x64xf32>
    %c0_13 = arith.constant 0 : index
    %c3 = arith.constant 3 : index
    %61 = vector.load %arg2[%c0_13, %c3] : memref<8x16xf32, #tpu.memory_space<vmem>>, vector<8x1xf32>
    %c0_14 = arith.constant 0 : index
    %c11 = arith.constant 11 : index
    %62 = vector.load %arg2[%c0_14, %c11] : memref<8x16xf32, #tpu.memory_space<vmem>>, vector<8x1xf32>
    %63 = vector.broadcast %61 : vector<8x1xf32> to vector<8x64xf32>
    %64 = arith.mulf %63, %58 : vector<8x64xf32>
    %65 = arith.addf %49, %64 : vector<8x64xf32>
    %66 = vector.broadcast %62 : vector<8x1xf32> to vector<8x64xf32>
    %67 = arith.mulf %66, %60 : vector<8x64xf32>
    %68 = arith.subf %65, %67 : vector<8x64xf32>
    %69 = vector.broadcast %61 : vector<8x1xf32> to vector<8x64xf32>
    %70 = arith.mulf %69, %60 : vector<8x64xf32>
    %71 = arith.addf %55, %70 : vector<8x64xf32>
    %72 = vector.broadcast %62 : vector<8x1xf32> to vector<8x64xf32>
    %73 = arith.mulf %72, %58 : vector<8x64xf32>
    %74 = arith.addf %71, %73 : vector<8x64xf32>
    %cst_15 = arith.constant 0.000000e+00 : f32
    %75 = vector.broadcast %cst_15 : f32 to vector<8x4xf32>
    %76 = vector.extract_strided_slice %0 {offsets = [0, 0], sizes = [8, 60], strides = [1, 1]} : vector<8x64xf32> to vector<8x60xf32>
    %77 = tpu.concatenate %75, %76 in 1 : vector<8x4xf32>, vector<8x60xf32> -> vector<8x64xf32>
    %78 = vector.extract_strided_slice %1 {offsets = [0, 0], sizes = [8, 60], strides = [1, 1]} : vector<8x64xf32> to vector<8x60xf32>
    %79 = tpu.concatenate %75, %78 in 1 : vector<8x4xf32>, vector<8x60xf32> -> vector<8x64xf32>
    %c0_16 = arith.constant 0 : index
    %c4 = arith.constant 4 : index
    %80 = vector.load %arg2[%c0_16, %c4] : memref<8x16xf32, #tpu.memory_space<vmem>>, vector<8x1xf32>
    %c0_17 = arith.constant 0 : index
    %c12 = arith.constant 12 : index
    %81 = vector.load %arg2[%c0_17, %c12] : memref<8x16xf32, #tpu.memory_space<vmem>>, vector<8x1xf32>
    %82 = vector.broadcast %80 : vector<8x1xf32> to vector<8x64xf32>
    %83 = arith.mulf %82, %77 : vector<8x64xf32>
    %84 = arith.addf %68, %83 : vector<8x64xf32>
    %85 = vector.broadcast %81 : vector<8x1xf32> to vector<8x64xf32>
    %86 = arith.mulf %85, %79 : vector<8x64xf32>
    %87 = arith.subf %84, %86 : vector<8x64xf32>
    %88 = vector.broadcast %80 : vector<8x1xf32> to vector<8x64xf32>
    %89 = arith.mulf %88, %79 : vector<8x64xf32>
    %90 = arith.addf %74, %89 : vector<8x64xf32>
    %91 = vector.broadcast %81 : vector<8x1xf32> to vector<8x64xf32>
    %92 = arith.mulf %91, %77 : vector<8x64xf32>
    %93 = arith.addf %90, %92 : vector<8x64xf32>
    %cst_18 = arith.constant 0.000000e+00 : f32
    %94 = vector.broadcast %cst_18 : f32 to vector<8x5xf32>
    %95 = vector.extract_strided_slice %0 {offsets = [0, 0], sizes = [8, 59], strides = [1, 1]} : vector<8x64xf32> to vector<8x59xf32>
    %96 = tpu.concatenate %94, %95 in 1 : vector<8x5xf32>, vector<8x59xf32> -> vector<8x64xf32>
    %97 = vector.extract_strided_slice %1 {offsets = [0, 0], sizes = [8, 59], strides = [1, 1]} : vector<8x64xf32> to vector<8x59xf32>
    %98 = tpu.concatenate %94, %97 in 1 : vector<8x5xf32>, vector<8x59xf32> -> vector<8x64xf32>
    %c0_19 = arith.constant 0 : index
    %c5 = arith.constant 5 : index
    %99 = vector.load %arg2[%c0_19, %c5] : memref<8x16xf32, #tpu.memory_space<vmem>>, vector<8x1xf32>
    %c0_20 = arith.constant 0 : index
    %c13 = arith.constant 13 : index
    %100 = vector.load %arg2[%c0_20, %c13] : memref<8x16xf32, #tpu.memory_space<vmem>>, vector<8x1xf32>
    %101 = vector.broadcast %99 : vector<8x1xf32> to vector<8x64xf32>
    %102 = arith.mulf %101, %96 : vector<8x64xf32>
    %103 = arith.addf %87, %102 : vector<8x64xf32>
    %104 = vector.broadcast %100 : vector<8x1xf32> to vector<8x64xf32>
    %105 = arith.mulf %104, %98 : vector<8x64xf32>
    %106 = arith.subf %103, %105 : vector<8x64xf32>
    %107 = vector.broadcast %99 : vector<8x1xf32> to vector<8x64xf32>
    %108 = arith.mulf %107, %98 : vector<8x64xf32>
    %109 = arith.addf %93, %108 : vector<8x64xf32>
    %110 = vector.broadcast %100 : vector<8x1xf32> to vector<8x64xf32>
    %111 = arith.mulf %110, %96 : vector<8x64xf32>
    %112 = arith.addf %109, %111 : vector<8x64xf32>
    %cst_21 = arith.constant 0.000000e+00 : f32
    %113 = vector.broadcast %cst_21 : f32 to vector<8x6xf32>
    %114 = vector.extract_strided_slice %0 {offsets = [0, 0], sizes = [8, 58], strides = [1, 1]} : vector<8x64xf32> to vector<8x58xf32>
    %115 = tpu.concatenate %113, %114 in 1 : vector<8x6xf32>, vector<8x58xf32> -> vector<8x64xf32>
    %116 = vector.extract_strided_slice %1 {offsets = [0, 0], sizes = [8, 58], strides = [1, 1]} : vector<8x64xf32> to vector<8x58xf32>
    %117 = tpu.concatenate %113, %116 in 1 : vector<8x6xf32>, vector<8x58xf32> -> vector<8x64xf32>
    %c0_22 = arith.constant 0 : index
    %c6 = arith.constant 6 : index
    %118 = vector.load %arg2[%c0_22, %c6] : memref<8x16xf32, #tpu.memory_space<vmem>>, vector<8x1xf32>
    %c0_23 = arith.constant 0 : index
    %c14 = arith.constant 14 : index
    %119 = vector.load %arg2[%c0_23, %c14] : memref<8x16xf32, #tpu.memory_space<vmem>>, vector<8x1xf32>
    %120 = vector.broadcast %118 : vector<8x1xf32> to vector<8x64xf32>
    %121 = arith.mulf %120, %115 : vector<8x64xf32>
    %122 = arith.addf %106, %121 : vector<8x64xf32>
    %123 = vector.broadcast %119 : vector<8x1xf32> to vector<8x64xf32>
    %124 = arith.mulf %123, %117 : vector<8x64xf32>
    %125 = arith.subf %122, %124 : vector<8x64xf32>
    %126 = vector.broadcast %118 : vector<8x1xf32> to vector<8x64xf32>
    %127 = arith.mulf %126, %117 : vector<8x64xf32>
    %128 = arith.addf %112, %127 : vector<8x64xf32>
    %129 = vector.broadcast %119 : vector<8x1xf32> to vector<8x64xf32>
    %130 = arith.mulf %129, %115 : vector<8x64xf32>
    %131 = arith.addf %128, %130 : vector<8x64xf32>
    %cst_24 = arith.constant 0.000000e+00 : f32
    %132 = vector.broadcast %cst_24 : f32 to vector<8x7xf32>
    %133 = vector.extract_strided_slice %0 {offsets = [0, 0], sizes = [8, 57], strides = [1, 1]} : vector<8x64xf32> to vector<8x57xf32>
    %134 = tpu.concatenate %132, %133 in 1 : vector<8x7xf32>, vector<8x57xf32> -> vector<8x64xf32>
    %135 = vector.extract_strided_slice %1 {offsets = [0, 0], sizes = [8, 57], strides = [1, 1]} : vector<8x64xf32> to vector<8x57xf32>
    %136 = tpu.concatenate %132, %135 in 1 : vector<8x7xf32>, vector<8x57xf32> -> vector<8x64xf32>
    %c0_25 = arith.constant 0 : index
    %c7 = arith.constant 7 : index
    %137 = vector.load %arg2[%c0_25, %c7] : memref<8x16xf32, #tpu.memory_space<vmem>>, vector<8x1xf32>
    %c0_26 = arith.constant 0 : index
    %c15 = arith.constant 15 : index
    %138 = vector.load %arg2[%c0_26, %c15] : memref<8x16xf32, #tpu.memory_space<vmem>>, vector<8x1xf32>
    %139 = vector.broadcast %137 : vector<8x1xf32> to vector<8x64xf32>
    %140 = arith.mulf %139, %134 : vector<8x64xf32>
    %141 = arith.addf %125, %140 : vector<8x64xf32>
    %142 = vector.broadcast %138 : vector<8x1xf32> to vector<8x64xf32>
    %143 = arith.mulf %142, %136 : vector<8x64xf32>
    %144 = arith.subf %141, %143 : vector<8x64xf32>
    %145 = vector.broadcast %137 : vector<8x1xf32> to vector<8x64xf32>
    %146 = arith.mulf %145, %136 : vector<8x64xf32>
    %147 = arith.addf %131, %146 : vector<8x64xf32>
    %148 = vector.broadcast %138 : vector<8x1xf32> to vector<8x64xf32>
    %149 = arith.mulf %148, %134 : vector<8x64xf32>
    %150 = arith.addf %147, %149 : vector<8x64xf32>
    %151 = tpu.concatenate %144, %150 in 1 : vector<8x64xf32>, vector<8x64xf32> -> vector<8x128xf32>
    %152 = arith.mulf %151, %151 : vector<8x128xf32>
    %cst_27 = arith.constant dense<0.000000e+00> : vector<8xf32>
    %153 = vector.multi_reduction <add>, %152, %cst_27 [1] : vector<8x128xf32> to vector<8xf32>
    %154 = vector.shape_cast %153 : vector<8xf32> to vector<8x1xf32>
    %cst_28 = arith.constant 1.562500e-02 : f32
    %155 = vector.broadcast %cst_28 : f32 to vector<8x1xf32>
    %156 = arith.mulf %154, %155 : vector<8x1xf32>
    %c0_29 = arith.constant 0 : index
    %157 = memref.load %arg4[%c0_29] : memref<1xf32, #tpu.memory_space<smem>>
    %158 = vector.broadcast %157 : f32 to vector<8x1xf32>
    %159 = arith.mulf %156, %158 : vector<8x1xf32>
    %cst_30 = arith.constant 5.000000e-01 : f32
    %160 = vector.broadcast %cst_30 : f32 to vector<8x1xf32>
    %161 = arith.mulf %159, %160 : vector<8x1xf32>
    %162 = math.sqrt %161 : vector<8x1xf32>
    %cst_31 = arith.constant 1.000000e+02 : f32
    %163 = vector.broadcast %cst_31 : f32 to vector<8x1xf32>
    %164 = arith.mulf %162, %163 : vector<8x1xf32>
    %c0_32 = arith.constant 0 : index
    %c0_33 = arith.constant 0 : index
    %165 = vector.load %arg3[%c0_32, %c0_33] : memref<8x128xf32, #tpu.memory_space<vmem>>, vector<8x128xf32>
    %166 = vector.broadcast %164 : vector<8x1xf32> to vector<8x128xf32>
    %167 = arith.mulf %166, %165 : vector<8x128xf32>
    %168 = arith.addf %151, %167 : vector<8x128xf32>
    %c0_34 = arith.constant 0 : index
    %c0_35 = arith.constant 0 : index
    %169 = vector.load %arg5[%c0_34, %c0_35] : memref<8x128xf32, #tpu.memory_space<vmem>>, vector<8x128xf32>
    tpu.vector_store %arg5[%c0_34, %c0_35], %168 {strides = array<i32>} : memref<8x128xf32, #tpu.memory_space<vmem>>, vector<8x128xf32>,
    return
  }
  func.func @transform_0(%arg0: i32) -> (i32, i32) {
    %c0_i32 = arith.constant 0 : i32
    %c0_i32_0 = arith.constant 0 : i32
    return %arg0, %c0_i32 : i32, i32
  }
  func.func @transform_1(%arg0: i32) -> (i32, i32) {
    %c0_i32 = arith.constant 0 : i32
    %c0_i32_0 = arith.constant 0 : i32
    return %arg0, %c0_i32 : i32, i32
  }
  func.func @transform_2(%arg0: i32) -> (i32, i32) {
    %c0_i32 = arith.constant 0 : i32
    %c0_i32_0 = arith.constant 0 : i32
    return %arg0, %c0_i32 : i32, i32
  }
  func.func @transform_3(%arg0: i32) -> i32 {
    %c0_i32 = arith.constant 0 : i32
    %c0_i32_0 = arith.constant 0 : i32
    return %c0_i32 : i32
  }
  func.func @transform_4(%arg0: i32) -> (i32, i32) {
    %c0_i32 = arith.constant 0 : i32
    %c0_i32_0 = arith.constant 0 : i32
    return %arg0, %c0_i32 : i32, i32
  }
}

</mosaic_0001>

<llo_original>
// kernel: plain_forward.3
$region0: #{plain_forward.3}
  #allocation0 [shape = 'u32[]', space=smem, size = 0x4, offset = 0x4, fixed_abs, tag = 'smem constant byte address 0x4 - core index']
  #allocation1 [shape = 'u32[72,128]{1,0:T(1,128)}', space=vmem, size = 0x9000, scoped, tag = 'internal scratch']
  #allocation2 [shape = 'f32[1]{0:T(128)S(6)}', space=smem, size = 0x200, scoped, tag = 'scoped memory for plain_forward.3']
  %s0 = inlined_call_operand.vmem [shape: f32[8,128], index: 0, kind: input, shape index: {}]
  %s1 = inlined_call_operand.vmem [shape: f32[8,16], index: 1, kind: input, shape index: {}]
  %s2 = inlined_call_operand.vmem [shape: f32[8,128], index: 2, kind: input, shape index: {}]
  %s3 = inlined_call_operand.<no memory space> [shape: f32[1], index: 3, kind: input, shape index: {}]
  %s4 = inlined_call_operand.vmem [shape: f32[8,128], index: 4, kind: output, shape index: {}]
  %s5 = sld [smem:[#allocation0]]
  $region26: #{plain_forward.3} parent=0
    _
  %s7 = ssub.s32 1, %s5
  %s8 = scalar_select 0, %s7, %s5
  %9 = sst [smem:[#allocation2]] %s3
  // Predicated region
  $region2: #{plain_forward.3} parent=0 // pred_check
    _
  $region3: #{plain_forward.3} parent=0 // pred_check_branch
    %11 = sbr.rel (0) target = $region5
  $region4: #{plain_forward.3} parent=0 // pred_region
    _
  $region5: #{plain_forward.3} parent=0 // pred_fallthru
    _
  // Predicated region
  $region6: #{plain_forward.3} parent=0 // pred_check
    _
  $region7: #{plain_forward.3} parent=0 // pred_check_branch
    %13 = sbr.rel (0) target = $region9
  $region8: #{plain_forward.3} parent=0 // pred_region
    _
  $region9: #{plain_forward.3} parent=0 // pred_fallthru
    _
  // Predicated region
  $region10: #{plain_forward.3} parent=0 // pred_check
    _
  $region11: #{plain_forward.3} parent=0 // pred_check_branch
    %15 = sbr.rel (0) target = $region13
  $region12: #{plain_forward.3} parent=0 // pred_region
    _
  $region13: #{plain_forward.3} parent=0 // pred_fallthru
    _
  // Predicated region
  $region14: #{plain_forward.3} parent=0 // pred_check
    _
  $region15: #{plain_forward.3} parent=0 // pred_check_branch
    %17 = sbr.rel (0) target = $region17
  $region16: #{plain_forward.3} parent=0 // pred_region
    _
  $region17: #{plain_forward.3} parent=0 // pred_fallthru
    _
  %v18 = vld [vmem:[%s0] sm:$0xff]
  %v19 = vld [vmem:[%s1] sm:$0xff]
  %21 = vset.pattern.permute.xlu0 0
  %22 = vperm.xlu0 %21, %v19
  %v23 = vpop.permute.xlu0 %22
  %v25 = vmul.f32 %v23, %v18
  %v26 = vadd.f32 %v25, 0.0
  %27 = vset.pattern.permute.xlu0 8
  %28 = vperm.xlu0 %27, %v19
  %v29 = vpop.permute.xlu0 %28
  %v31 = vmul.f32 %v29, %v18
  %33 = vrot.lane.b32.xlu0 %v31, 64
  %v34 = vpop.permute.xlu0 %33
  %v36 = vsub.f32 %v26, %v34
  %v37 = vadd.f32 %v26, %v34
  %39 = vrot.lane.b32.xlu0 %v18, 1
  %v40 = vpop.permute.xlu0 %39
  %vm42 = vcmask 7168
  %v43 = vsel %vm42, 0.0, %v40
  %44 = vrot.lane.b32.xlu0 %v18, 65
  %v45 = vpop.permute.xlu0 %44
  %v47 = vsel %vm42, 0.0, %v45
  %48 = vset.pattern.permute.xlu0 1
  %49 = vperm.xlu0 %48, %v19
  %v50 = vpop.permute.xlu0 %49
  %v52 = vmul.f32 %v50, %v43
  %v53 = vadd.f32 %v36, %v52
  %54 = vset.pattern.permute.xlu0 9
  %55 = vperm.xlu0 %54, %v19
  %v56 = vpop.permute.xlu0 %55
  %v58 = vmul.f32 %v56, %v47
  %v59 = vsub.f32 %v53, %v58
  %v60 = vmul.f32 %v50, %v47
  %62 = vrot.lane.b32.xlu0 %v60, 64
  %v63 = vpop.permute.xlu0 %62
  %v65 = vadd.f32 %v37, %v63
  %v66 = vmul.f32 %v56, %v43
  %68 = vrot.lane.b32.xlu0 %v66, 64
  %v69 = vpop.permute.xlu0 %68
  %v71 = vadd.f32 %v65, %v69
  %72 = vrot.lane.b32.xlu0 %v18, 2
  %v73 = vpop.permute.xlu0 %72
  %vm75 = vcmask 15360
  %v76 = vsel %vm75, 0.0, %v73
  %77 = vrot.lane.b32.xlu0 %v18, 66
  %v78 = vpop.permute.xlu0 %77
  %v80 = vsel %vm75, 0.0, %v78
  %81 = vset.pattern.permute.xlu0 2
  %82 = vperm.xlu0 %81, %v19
  %v83 = vpop.permute.xlu0 %82
  %v85 = vmul.f32 %v83, %v76
  %v86 = vadd.f32 %v59, %v85
  %87 = vset.pattern.permute.xlu0 10
  %88 = vperm.xlu0 %87, %v19
  %v89 = vpop.permute.xlu0 %88
  %v91 = vmul.f32 %v89, %v80
  %v92 = vsub.f32 %v86, %v91
  %v93 = vmul.f32 %v83, %v80
  %95 = vrot.lane.b32.xlu0 %v93, 64
  %v96 = vpop.permute.xlu0 %95
  %v98 = vadd.f32 %v71, %v96
  %v99 = vmul.f32 %v89, %v76
  %101 = vrot.lane.b32.xlu0 %v99, 64
  %v102 = vpop.permute.xlu0 %101
  %v104 = vadd.f32 %v98, %v102
  %105 = vrot.lane.b32.xlu0 %v18, 3
  %v106 = vpop.permute.xlu0 %105
  %vm108 = vcmask 23552
  %v109 = vsel %vm108, 0.0, %v106
  %110 = vrot.lane.b32.xlu0 %v18, 67
  %v111 = vpop.permute.xlu0 %110
  %v113 = vsel %vm108, 0.0, %v111
  %114 = vset.pattern.permute.xlu0 3
  %115 = vperm.xlu0 %114, %v19
  %v116 = vpop.permute.xlu0 %115
  %v118 = vmul.f32 %v116, %v109
  %v119 = vadd.f32 %v92, %v118
  %120 = vset.pattern.permute.xlu0 11
  %121 = vperm.xlu0 %120, %v19
  %v122 = vpop.permute.xlu0 %121
  %v124 = vmul.f32 %v122, %v113
  %v125 = vsub.f32 %v119, %v124
  %v126 = vmul.f32 %v116, %v113
  %128 = vrot.lane.b32.xlu0 %v126, 64
  %v129 = vpop.permute.xlu0 %128
  %v131 = vadd.f32 %v104, %v129
  %v132 = vmul.f32 %v122, %v109
  %134 = vrot.lane.b32.xlu0 %v132, 64
  %v135 = vpop.permute.xlu0 %134
  %v137 = vadd.f32 %v131, %v135
  %138 = vrot.lane.b32.xlu0 %v18, 4
  %v139 = vpop.permute.xlu0 %138
  %vm141 = vcmask 31744
  %v142 = vsel %vm141, 0.0, %v139
  %143 = vrot.lane.b32.xlu0 %v18, 68
  %v144 = vpop.permute.xlu0 %143
  %v146 = vsel %vm141, 0.0, %v144
  %147 = vset.pattern.permute.xlu0 4
  %148 = vperm.xlu0 %147, %v19
  %v149 = vpop.permute.xlu0 %148
  %v151 = vmul.f32 %v149, %v142
  %v152 = vadd.f32 %v125, %v151
  %153 = vset.pattern.permute.xlu0 12
  %154 = vperm.xlu0 %153, %v19
  %v155 = vpop.permute.xlu0 %154
  %v157 = vmul.f32 %v155, %v146
  %v158 = vsub.f32 %v152, %v157
  %v159 = vmul.f32 %v149, %v146
  %161 = vrot.lane.b32.xlu0 %v159, 64
  %v162 = vpop.permute.xlu0 %161
  %v164 = vadd.f32 %v137, %v162
  %v165 = vmul.f32 %v155, %v142
  %167 = vrot.lane.b32.xlu0 %v165, 64
  %v168 = vpop.permute.xlu0 %167
  %v170 = vadd.f32 %v164, %v168
  %171 = vrot.lane.b32.xlu0 %v18, 5
  %v172 = vpop.permute.xlu0 %171
  %vm174 = vcmask 39936
  %v175 = vsel %vm174, 0.0, %v172
  %176 = vrot.lane.b32.xlu0 %v18, 69
  %v177 = vpop.permute.xlu0 %176
  %v179 = vsel %vm174, 0.0, %v177
  %180 = vset.pattern.permute.xlu0 5
  %181 = vperm.xlu0 %180, %v19
  %v182 = vpop.permute.xlu0 %181
  %v184 = vmul.f32 %v182, %v175
  %v185 = vadd.f32 %v158, %v184
  %186 = vset.pattern.permute.xlu0 13
  %187 = vperm.xlu0 %186, %v19
  %v188 = vpop.permute.xlu0 %187
  %v190 = vmul.f32 %v188, %v179
  %v191 = vsub.f32 %v185, %v190
  %v192 = vmul.f32 %v182, %v179
  %194 = vrot.lane.b32.xlu0 %v192, 64
  %v195 = vpop.permute.xlu0 %194
  %v197 = vadd.f32 %v170, %v195
  %v198 = vmul.f32 %v188, %v175
  %200 = vrot.lane.b32.xlu0 %v198, 64
  %v201 = vpop.permute.xlu0 %200
  %v203 = vadd.f32 %v197, %v201
  %204 = vrot.lane.b32.xlu0 %v18, 6
  %v205 = vpop.permute.xlu0 %204
  %vm207 = vcmask 48128
  %v208 = vsel %vm207, 0.0, %v205
  %209 = vrot.lane.b32.xlu0 %v18, 70
  %v210 = vpop.permute.xlu0 %209
  %v212 = vsel %vm207, 0.0, %v210
  %213 = vset.pattern.permute.xlu0 6
  %214 = vperm.xlu0 %213, %v19
  %v215 = vpop.permute.xlu0 %214
  %v217 = vmul.f32 %v215, %v208
  %v218 = vadd.f32 %v191, %v217
  %219 = vset.pattern.permute.xlu0 14
  %220 = vperm.xlu0 %219, %v19
  %v221 = vpop.permute.xlu0 %220
  %v223 = vmul.f32 %v221, %v212
  %v224 = vsub.f32 %v218, %v223
  %v225 = vmul.f32 %v215, %v212
  %227 = vrot.lane.b32.xlu0 %v225, 64
  %v228 = vpop.permute.xlu0 %227
  %v230 = vadd.f32 %v203, %v228
  %v231 = vmul.f32 %v221, %v208
  %233 = vrot.lane.b32.xlu0 %v231, 64
  %v234 = vpop.permute.xlu0 %233
  %v236 = vadd.f32 %v230, %v234
  %237 = vrot.lane.b32.xlu0 %v18, 7
  %v238 = vpop.permute.xlu0 %237
  %vm240 = vcmask 56320
  %v241 = vsel %vm240, 0.0, %v238
  %242 = vrot.lane.b32.xlu0 %v18, 71
  %v243 = vpop.permute.xlu0 %242
  %v245 = vsel %vm240, 0.0, %v243
  %246 = vset.pattern.permute.xlu0 7
  %247 = vperm.xlu0 %246, %v19
  %v248 = vpop.permute.xlu0 %247
  %v250 = vmul.f32 %v248, %v241
  %v251 = vadd.f32 %v224, %v250
  %252 = vset.pattern.permute.xlu0 15
  %253 = vperm.xlu0 %252, %v19
  %v254 = vpop.permute.xlu0 %253
  %v256 = vmul.f32 %v254, %v245
  %v257 = vsub.f32 %v251, %v256
  %v258 = vmul.f32 %v248, %v245
  %260 = vrot.lane.b32.xlu0 %v258, 64
  %v261 = vpop.permute.xlu0 %260
  %v263 = vadd.f32 %v236, %v261
  %v264 = vmul.f32 %v254, %v241
  %266 = vrot.lane.b32.xlu0 %v264, 64
  %v267 = vpop.permute.xlu0 %266
  %v269 = vadd.f32 %v263, %v267
  %vm270 = vcmask 523264
  %v271 = vsel %vm270, %v257, %v269
  %v272 = vmul.f32 %v271, %v271
  %273 = vadd.xlane.f32.xlu0 %v272
  %v274 = vpop.xlane.xlu0 %273
  %v275 = vmul.f32 %v274, 0.015625
  %s276 = sld [smem:[#allocation2]]
  %v277 = vstv %s276
  %v278 = vmul.f32 %v275, %v277
  %v279 = vmul.f32 %v278, 0.5
  %v280 = vrsqrt.pop %v279
  %v281 = vmul.f32 %v280, %v279
  %v282 = vmul.f32 %v281, %v280
  %v283 = vmul.f32 0.5, %v282
  %v284 = vsub.f32 1.5, %v283
  %v285 = vmul.f32 %v280, %v284
  %v286 = vmul.f32 %v279, %v285
  %vm287 = vcmp.eq.f32.partialorder %v279, inf
  %v288 = vsel %vm287, %v279, %v286
  %vm289 = vcmp.eq.f32.partialorder %v279, 0.0
  %v290 = vand.u32 %v279, 2147483648
  %v291 = vsel %vm289, %v290, %v288
  %v292 = vmul.f32 %v291, 100.0
  %v293 = vld [vmem:[%s2] sm:$0xff]
  %v294 = vmul.f32 %v292, %v293
  %v295 = vadd.f32 %v271, %v294
  %296 = vst [vmem:[%s4] sm:$0xff] %v295
  // Predicated region
  $region18: #{plain_forward.3} parent=0 // pred_check
    _
  $region19: #{plain_forward.3} parent=0 // pred_check_branch
    %298 = sbr.rel (0) target = $region21
  $region20: #{plain_forward.3} parent=0 // pred_region
    _
  $region21: #{plain_forward.3} parent=0 // pred_fallthru
    _
  // Predicated region
  $region22: #{plain_forward.3} parent=0 // pred_check
    _
  $region23: #{plain_forward.3} parent=0 // pred_check_branch
    %300 = sbr.rel (0) target = $region25
  $region24: #{plain_forward.3} parent=0 // pred_region
    _
  $region25: #{plain_forward.3} parent=0 // pred_fallthru
    _

</llo_original>
